<compile_context>
chip_gen: v5e
topology: v5e:2x2
jax: 0.10.0
libtpu: 0.0.40
codegen_flags: <defaults>
</compile_context>

<pallas_src>
import jax
import jax.numpy as jnp
from jax.experimental import pallas as pl
from jax.experimental.pallas import tpu as pltpu

DTYPE = jnp.float32


def _round_up(x, m):
    return (x + m - 1) // m * m


def _vmem_limit_bytes():
    """~80% of physical VMEM (v5e/v6e: ~107 MiB, v7x: ~53 MiB)."""
    try:
        cap = pltpu.get_tpu_info().vmem_capacity_bytes
    except Exception:
        cap = 64 * 2 ** 20
    return int(cap * 0.8)


def _compiler_params():
    # Every grid axis is a fully independent row block -> "parallel"
    # (sharded across both TensorCores on v7x).
    return pltpu.CompilerParams(dimension_semantics=("parallel",),
                                vmem_limit_bytes=_vmem_limit_bytes())


# --------------------------------------------------------------------------
# Pallas kernels
# --------------------------------------------------------------------------
def _gcn_relu_kernel(m_ref, xw_ref, b_ref, h_ref):
    """H_i = relu(M_i @ (X W1) + b1); M streamed as row tiles, XW1 resident."""
    y = jnp.dot(m_ref[...], xw_ref[...],
                preferred_element_type=jnp.float32) + b_ref[...]
    h_ref[...] = jnp.maximum(y, 0.0).astype(h_ref.dtype)


def _gcn_tanh_kernel(m_ref, hw_ref, b_ref, z_ref, zt_ref):
    """Z_i = tanh(M_i @ (H W2) + b2); also emits the Z^T column stripe so the
    decoder never has to relayout the RHS."""
    y = jnp.tanh(jnp.dot(m_ref[...], hw_ref[...],
                         preferred_element_type=jnp.float32) + b_ref[...])
    z_ref[...] = y.astype(z_ref.dtype)
    zt_ref[...] = y.T.astype(zt_ref.dtype)


def _decoder_residual_kernel(z_ref, zt_ref, x_ref, rep_ref, adj_ref,
                             enc_ref, prob_ref):
    """prob_i = sigmoid(adj_i + Z_i @ Z^T); enc_i = repeat(Z_i) + X_i."""
    logits = jnp.dot(z_ref[...], zt_ref[...],
                     preferred_element_type=jnp.float32)
    # torch.nan_to_num(logits, 0): provable no-op for finite inputs
    # (Z = tanh(...) is bounded), so it is dropped.
    prob_ref[...] = jax.nn.sigmoid(
        adj_ref[...].astype(jnp.float32) + logits).astype(prob_ref.dtype)
    # repeat(1, F // h2) expressed as a lane-dense 0/1 matmul Z_i @ R.
    enc_ref[...] = (jnp.dot(z_ref[...], rep_ref[...],
                            preferred_element_type=jnp.float32)
                    + x_ref[...]).astype(enc_ref.dtype)


def _decoder_plain_kernel(z_ref, zt_ref, prob_ref):
    """residuals=False: prob_i = Z_i @ Z^T (no adj stream, no sigmoid)."""
    prob_ref[...] = jnp.dot(z_ref[...], zt_ref[...],
                            preferred_element_type=jnp.float32
                            ).astype(prob_ref.dtype)


# --------------------------------------------------------------------------
# Plain-JAX glue (edge-list scatter / graph bookkeeping)
# --------------------------------------------------------------------------
def gcn_norm_dense(edge_index, edge_weight, n):
    """Dense D^{-1/2} (A + I) D^{-1/2} matching PyG gcn_norm with self loops:
    M[dst, src] = dinv[dst] * w * dinv[src]; propagate == M @ X."""
    src, dst = edge_index[0], edge_index[1]
    deg = jnp.zeros((n,), DTYPE).at[dst].add(edge_weight) + 1.0
    dinv = jnp.where(deg > 0, 1.0 / jnp.sqrt(deg), 0.0)
    a = jnp.zeros((n, n), DTYPE).at[dst, src].add(edge_weight)
    a = a + jnp.eye(n, dtype=DTYPE)
    return dinv[:, None] * a * dinv[None, :]


def rebuild_adj_matrix(num_nodes, edge_index, edge_weight):
    src, dst = edge_index[0], edge_index[1]
    adj = jnp.zeros((num_nodes, num_nodes), DTYPE)
    adj = adj.at[src, dst].set(edge_weight)
    adj = adj.at[dst, src].set(edge_weight)
    return adj


# --------------------------------------------------------------------------
# ResidualGenerator (forward only; training=False so dropout is identity)
# --------------------------------------------------------------------------
class ResidualGeneratorPallas:
    def __init__(self, n_features, hidden_dim, residuals=True, seed=0,
                 matmul_dtype=jnp.bfloat16,   # MXU operand dtype (f32 acc)
                 nn_dtype=jnp.bfloat16,       # dtype of the N^2 adj/prob HBM surfaces
                 row_tile=256):               # 256 matches the v6e/v7x MXU
        h2 = hidden_dim // 2
        if residuals:
            # torch's repeat(1, F // h2) + add requires F to be a multiple.
            assert n_features % h2 == 0, \
                "n_features must be a multiple of hidden_dim // 2"
        self.n_features = n_features
        self.hidden_dim = hidden_dim
        self.residuals = residuals
        self.matmul_dtype = matmul_dtype
        self.nn_dtype = nn_dtype
        self.row_tile = row_tile
        key = jax.random.PRNGKey(seed)
        k1, k2 = jax.random.split(key)
        # GCNConv weights: lin.weight (no internal bias) + separate conv bias.
        self.w1 = (jax.random.normal(k1, (n_features, hidden_dim)) * 0.1).astype(DTYPE)
        self.b1 = jnp.zeros((hidden_dim,), DTYPE)
        self.w2 = (jax.random.normal(k2, (hidden_dim, h2)) * 0.1).astype(DTYPE)
        self.b2 = jnp.zeros((h2,), DTYPE)

    def __call__(self, node_features, edge_list, edge_attr):
        x = node_features.astype(DTYPE)
        ew = edge_attr.astype(DTYPE)
        n, f = x.shape
        h, h2 = self.hidden_dim, self.hidden_dim // 2
        mm, nnd = self.matmul_dtype, self.nn_dtype

        # ---- lane-dense padding (multiples of 128 / tm; zero padding is exact)
        tm = self.row_tile
        np_ = _round_up(n, tm)
        fp, hp, h2p = _round_up(f, 128), _round_up(h, 128), _round_up(h2, 128)
        grid = (np_ // tm,)
        cp = _compiler_params()

        # Normalized adjacency (edge-list scatter stays in plain JAX), pre-cast
        # to the MXU operand dtype in the wrapper (no in-kernel cast copies).
        m_p = jnp.zeros((np_, np_), DTYPE).at[:n, :n].set(
            gcn_norm_dense(edge_list, ew, n)).astype(mm)

        m_tiles = pl.BlockSpec((tm, np_), lambda i: (i, 0))

        def resident(shape):
            # Constant-index block: small on-chip resident (XW/HW/Z^T/bias/R).
            return pl.BlockSpec(shape, lambda i: (0, 0))

        # ---- encoder layer 1: H = relu(M @ (X W1) + b1) -------------------
        # Per-node linear X@W1 hoisted to a tiny XLA matmul (keeps X out of VMEM).
        xw1 = jnp.zeros((np_, hp), DTYPE).at[:n, :h].set(
            jnp.dot(x, self.w1, preferred_element_type=DTYPE)).astype(mm)
        b1_p = jnp.zeros((1, hp), DTYPE).at[0, :h].set(self.b1)

        h_p = pl.pallas_call(
            _gcn_relu_kernel,
            out_shape=jax.ShapeDtypeStruct((np_, hp), mm),
            grid=grid,
            in_specs=[m_tiles, resident((np_, hp)), resident((1, hp))],
            out_specs=pl.BlockSpec((tm, hp), lambda i: (i, 0)),
            compiler_params=cp,
        )(m_p, xw1, b1_p)
        # dropout(p=0.2, training=False) -> identity

        # ---- encoder layer 2: Z = tanh(M @ (H W2) + b2), also emit Z^T ----
        w2_p = jnp.zeros((hp, h2p), DTYPE).at[:h, :h2].set(self.w2).astype(mm)
        hw2 = jnp.dot(h_p, w2_p, preferred_element_type=DTYPE).astype(mm)
        b2_p = jnp.zeros((1, h2p), DTYPE).at[0, :h2].set(self.b2)

        z_p, zt_p = pl.pallas_call(
            _gcn_tanh_kernel,
            out_shape=(jax.ShapeDtypeStruct((np_, h2p), mm),
                       jax.ShapeDtypeStruct((h2p, np_), mm)),
            grid=grid,
            in_specs=[m_tiles, resident((np_, h2p)), resident((1, h2p))],
            out_specs=(pl.BlockSpec((tm, h2p), lambda i: (i, 0)),
                       pl.BlockSpec((h2p, tm), lambda i: (0, i))),
            compiler_params=cp,
        )(m_p, hw2, b2_p)

        z_tiles = pl.BlockSpec((tm, h2p), lambda i: (i, 0))
        zt_resident = resident((h2p, np_))

        # ---- decoder + residual (HBM-bound N^2 pass) -----------------------
        if self.residuals:
            repeats = f // h2
            x_p = jnp.zeros((np_, fp), DTYPE).at[:n, :f].set(x)
            # "repeat along features" as a 0/1 matrix (lane-dense MXU op).
            rep = jnp.zeros((h2p, fp), DTYPE).at[
                jnp.tile(jnp.arange(h2), repeats), jnp.arange(f)].set(1.0).astype(mm)
            adj_p = jnp.zeros((np_, np_), DTYPE).at[:n, :n].set(
                rebuild_adj_matrix(n, edge_list, ew)).astype(nnd)

            enc_p, prob_p = pl.pallas_call(
                _decoder_residual_kernel,
                out_shape=(jax.ShapeDtypeStruct((np_, fp), DTYPE),
                           jax.ShapeDtypeStruct((np_, np_), nnd)),
                grid=grid,
                in_specs=[z_tiles,
                          zt_resident,
                          pl.BlockSpec((tm, fp), lambda i: (i, 0)),   # X rows
                          resident((h2p, fp)),                        # repeat matrix
                          pl.BlockSpec((tm, np_), lambda i: (i, 0))], # adj rows
                out_specs=(pl.BlockSpec((tm, fp), lambda i: (i, 0)),
                           pl.BlockSpec((tm, np_), lambda i: (i, 0))),
                compiler_params=cp,
            )(z_p, zt_p, x_p, rep, adj_p)
            enc = enc_p[:n, :f]
            prob = prob_p[:n, :n]
        else:
            # No adj stream at all in the non-residual path (no N^2 zero read).
            prob_p = pl.pallas_call(
                _decoder_plain_kernel,
                out_shape=jax.ShapeDtypeStruct((np_, np_), nnd),
                grid=grid,
                in_specs=[z_tiles, zt_resident],
                out_specs=pl.BlockSpec((tm, np_), lambda i: (i, 0)),
                compiler_params=cp,
            )(z_p, zt_p)
            enc = z_p[:n, :h2].astype(DTYPE)
            prob = prob_p[:n, :n]

        return enc, edge_list, prob


# --------------------------------------------------------------------------
# Pure-JAX reference (same math, no Pallas) for tolerance checking
# --------------------------------------------------------------------------
def reference_forward(model, node_features, edge_list, edge_attr):
    x = node_features.astype(DTYPE)
    ew = edge_attr.astype(DTYPE)
    n, f = x.shape
    hi = jax.lax.Precision.HIGHEST
    m = gcn_norm_dense(edge_list, ew, n)
    h = jnp.maximum(jnp.dot(m, jnp.dot(x, model.w1, precision=hi), precision=hi)
                    + model.b1, 0.0)
    z = jnp.tanh(jnp.dot(m, jnp.dot(h, model.w2, precision=hi), precision=hi)
                 + model.b2)
    logits = jnp.dot(z, z.T, precision=hi)
    if model.residuals:
        prob = jax.nn.sigmoid(rebuild_adj_matrix(n, edge_list, ew) + logits)
        enc = jnp.tile(z, (1, f // z.shape[1])) + x
    else:
        prob = logits
        enc = z
    return enc, prob


# --------------------------------------------------------------------------
if __name__ == "__main__":
    N = 8            # number of nodes
    N_FEATURES = 16  # node feature dim
    HIDDEN_DIM = 16  # encoder hidden dim -> conv2 output = 8, repeat factor = 2

    key = jax.random.PRNGKey(0)
    kx, ke = jax.random.split(key)
    node_features = jax.random.normal(kx, (N, N_FEATURES), DTYPE)

    # deterministic small edge list (one direction stored, like the PyTorch data)
    src = jnp.array([0, 1, 2, 3, 4, 5, 6, 0, 2, 4], dtype=jnp.int32)
    dst = jnp.array([1, 2, 3, 4, 5, 6, 7, 7, 5, 1], dtype=jnp.int32)
    edge_list = jnp.stack([src, dst])
    edge_attr = jax.random.uniform(ke, (src.shape[0],), DTYPE, 0.5, 1.5)

    # --- f32 MXU operands (bf16 N^2 surfaces): tight comparison vs reference --
    model = ResidualGeneratorPallas(N_FEATURES, HIDDEN_DIM, residuals=True,
                                    matmul_dtype=jnp.float32)
    enc, el, prob = model(node_features, edge_list, edge_attr)
    jax.block_until_ready((enc, prob))
    ref_enc, ref_prob = reference_forward(model, node_features, edge_list, edge_attr)
    assert enc.shape == (N, N_FEATURES)
    assert prob.shape == (N, N)
    assert float(jnp.max(jnp.abs(enc.astype(DTYPE) - ref_enc))) < 5e-2
    assert float(jnp.max(jnp.abs(prob.astype(DTYPE) - ref_prob))) < 5e-2

    # --- bf16 MXU operands / f32 accumulation (default), loose tolerance -----
    model_bf16 = ResidualGeneratorPallas(N_FEATURES, HIDDEN_DIM, residuals=True,
                                         matmul_dtype=jnp.bfloat16)
    enc_b, _, prob_b = model_bf16(node_features, edge_list, edge_attr)
    jax.block_until_ready((enc_b, prob_b))
    assert float(jnp.max(jnp.abs(enc_b.astype(DTYPE) - ref_enc))) < 1.5e-1
    assert float(jnp.max(jnp.abs(prob_b.astype(DTYPE) - ref_prob))) < 1.5e-1

    # --- non-residual path (enc = Z, prob = Z Z^T without sigmoid) -----------
    model_nr = ResidualGeneratorPallas(N_FEATURES, HIDDEN_DIM, residuals=False,
                                       matmul_dtype=jnp.float32)
    enc_nr, _, prob_nr = model_nr(node_features, edge_list, edge_attr)
    jax.block_until_ready((enc_nr, prob_nr))
    ref_enc_nr, ref_prob_nr = reference_forward(model_nr, node_features,
                                                edge_list, edge_attr)
    assert enc_nr.shape == (N, HIDDEN_DIM // 2)
    assert prob_nr.shape == (N, N)
    assert float(jnp.max(jnp.abs(prob_nr.astype(DTYPE) - ref_prob_nr))) < 5e-2

    print("KERNEL_OK")
</pallas_src>

<mosaic_0001>
module attributes {stable_mosaic.version = 11 : i64} {
  func.func @_gcn_relu_kernel(%arg0: i32, %arg1: memref<256x256xf32, #tpu.memory_space<vmem>>, %arg2: memref<256x128xf32, #tpu.memory_space<vmem>>, %arg3: memref<1x128xf32, #tpu.memory_space<vmem>>, %arg4: memref<256x128xf32, #tpu.memory_space<vmem>>) attributes {dimension_semantics = [#tpu.dimension_semantics<parallel>], iteration_bounds = array<i64: 1>, scalar_prefetch = 0 : i64, scratch_operands = 0 : i64, tpu.core_type = #tpu.core_type<tc>, window_params = [{transform_indices = @transform_0, window_bounds = array<i64: 256, 256>}, {pipeline_mode = #tpu.pipeline_mode<synchronous>, transform_indices = @transform_1, window_bounds = array<i64: 256, 128>}, {pipeline_mode = #tpu.pipeline_mode<synchronous>, transform_indices = @transform_2, window_bounds = array<i64: 1, 128>}, {transform_indices = @transform_3, window_bounds = array<i64: 256, 128>}]} {
    %c0 = arith.constant 0 : index
    %c0_0 = arith.constant 0 : index
    %0 = vector.load %arg1[%c0, %c0_0] : memref<256x256xf32, #tpu.memory_space<vmem>>, vector<256x256xf32>
    %c0_1 = arith.constant 0 : index
    %c0_2 = arith.constant 0 : index
    %1 = vector.load %arg2[%c0_1, %c0_2] : memref<256x128xf32, #tpu.memory_space<vmem>>, vector<256x128xf32>
    %cst = arith.constant dense<0.000000e+00> : vector<256x128xf32>
    %2 = tpu.matmul %0, %1, %cst {dimension_numbers = #tpu.dot_dimension_numbers<[1], [0], [0], [1], [0, 0, 1, 1], [], []>} : vector<256x256xf32>, vector<256x128xf32>, vector<256x128xf32> -> vector<256x128xf32>
    %c0_3 = arith.constant 0 : index
    %c0_4 = arith.constant 0 : index
    %3 = vector.load %arg3[%c0_3, %c0_4] : memref<1x128xf32, #tpu.memory_space<vmem>>, vector<1x128xf32>
    %4 = vector.broadcast %3 : vector<1x128xf32> to vector<256x128xf32>
    %5 = arith.addf %2, %4 : vector<256x128xf32>
    %cst_5 = arith.constant 0.000000e+00 : f32
    %6 = vector.broadcast %cst_5 : f32 to vector<256x128xf32>
    %7 = arith.maximumf %5, %6 : vector<256x128xf32>
    %c0_6 = arith.constant 0 : index
    %c0_7 = arith.constant 0 : index
    %8 = vector.load %arg4[%c0_6, %c0_7] : memref<256x128xf32, #tpu.memory_space<vmem>>, vector<256x128xf32>
    tpu.vector_store %arg4[%c0_6, %c0_7], %7 {strides = array<i32>} : memref<256x128xf32, #tpu.memory_space<vmem>>, vector<256x128xf32>,
    return
  }
  func.func @transform_0(%arg0: i32) -> (i32, i32) {
    %c0_i32 = arith.constant 0 : i32
    %c0_i32_0 = arith.constant 0 : i32
    return %arg0, %c0_i32 : i32, i32
  }
  func.func @transform_1(%arg0: i32) -> (i32, i32) {
    %c0_i32 = arith.constant 0 : i32
    %c0_i32_0 = arith.constant 0 : i32
    %c0_i32_1 = arith.constant 0 : i32
    return %c0_i32, %c0_i32_0 : i32, i32
  }
  func.func @transform_2(%arg0: i32) -> (i32, i32) {
    %c0_i32 = arith.constant 0 : i32
    %c0_i32_0 = arith.constant 0 : i32
    %c0_i32_1 = arith.constant 0 : i32
    return %c0_i32, %c0_i32_0 : i32, i32
  }
  func.func @transform_3(%arg0: i32) -> (i32, i32) {
    %c0_i32 = arith.constant 0 : i32
    %c0_i32_0 = arith.constant 0 : i32
    return %arg0, %c0_i32 : i32, i32
  }
}

</mosaic_0001>

<llo_original>
// kernel: tpu_custom_call.1
$region0: #{tpu_custom_call.1}
  #allocation0 [shape = 'u32[]', space=smem, size = 0x4, offset = 0x4, fixed_abs, tag = 'smem constant byte address 0x4 - core index']
  #allocation1 [shape = 'u32[72,128]{1,0:T(1,128)}', space=vmem, size = 0x9000, scoped, tag = 'internal scratch']
  %s0 = inlined_call_operand.hbm [shape: f32[256,256], index: 0, kind: input, shape index: {}]
  %s1 = inlined_call_operand.hbm [shape: f32[256,128], index: 1, kind: input, shape index: {}]
  %s2 = inlined_call_operand.vmem [shape: f32[1,128], index: 2, kind: input, shape index: {}]
  %s3 = inlined_call_operand.hbm [shape: f32[256,128], index: 3, kind: output, shape index: {}]
  %s4 = sld [smem:[#allocation0]]
  $region30: #{tpu_custom_call.1} parent=0
    _
  %s6 = ssub.s32 1, %s4
  %s7 = scalar_select 0, %s6, %s4
  $region1: #{tpu_custom_call.1} parent=0
    #allocation2 [shape = 'u8[262144]{0}', space=vmem, size = 0x40000, scoped, tag = 'input window, operand 0, single buffered']
    #allocation3 [shape = 's32[1]{0}', space=sflag, size = 0x4, scoped, tag = 'scoped memory for tpu_custom_call.1']
    #allocation4 [shape = 's32[1]{0}', space=sflag, size = 0x4, scoped, tag = 'scoped memory for tpu_custom_call.1']
    #allocation5 [shape = 'u8[131072]{0}', space=vmem, size = 0x20000, scoped, tag = 'input window, operand 1, single buffered']
    #allocation6 [shape = 's32[1]{0}', space=sflag, size = 0x4, scoped, tag = 'scoped memory for tpu_custom_call.1']
    #allocation7 [shape = 'u8[131072]{0}', space=vmem, size = 0x20000, scoped, tag = 'output window, operand 0, single buffered']
    %8 = vsyncpa [#allocation3], 0
    %9 = vsyncpa [#allocation6], 0
    %10 = vsyncpa [#allocation4], 0
    // Predicated region
    $region2: #{tpu_custom_call.1} parent=1 // pred_check
      _
    $region3: #{tpu_custom_call.1} parent=1 // pred_check_branch
      %12 = sbr.rel (0) target = $region5
    $region4: #{tpu_custom_call.1} parent=1 // pred_region
      %14 = vsyncadd [#allocation3], 0
      %s15 = sshll.u32 %s0, 4
      %s16 = int_to_ptr.hbm [resolvable:$true] %s15
      %s17 = sshll.u32 [#allocation2], 4
      %s18 = int_to_ptr.vmem [resolvable:$true] %s17
      %23 = dma.hbm_to_vmem [thread:$0]  %s16, 8192, %s18, [#allocation3], 256, 256, 16
    $region5: #{tpu_custom_call.1} parent=1 // pred_fallthru
      _
    // Predicated region
    $region6: #{tpu_custom_call.1} parent=1 // pred_check
      _
    $region7: #{tpu_custom_call.1} parent=1 // pred_check_branch
      %25 = sbr.rel (0) target = $region9
    $region8: #{tpu_custom_call.1} parent=1 // pred_region
      %27 = vsyncadd [#allocation6], 0
      %s28 = sshll.u32 %s1, 4
      %s29 = int_to_ptr.hbm [resolvable:$true] %s28
      %s30 = sshll.u32 [#allocation5], 4
      %s31 = int_to_ptr.vmem [resolvable:$true] %s30
      %36 = dma.hbm_to_vmem [thread:$0]  %s29, 4096, %s31, [#allocation6], 128, 128, 8
    $region9: #{tpu_custom_call.1} parent=1 // pred_fallthru
      _
    // Predicated region
    $region10: #{tpu_custom_call.1} parent=1 // pred_check
      _
    $region11: #{tpu_custom_call.1} parent=1 // pred_check_branch
      %38 = sbr.rel (0) target = $region13
    $region12: #{tpu_custom_call.1} parent=1 // pred_region
      _
    $region13: #{tpu_custom_call.1} parent=1 // pred_fallthru
      _
    // Predicated region
    $region14: #{tpu_custom_call.1} parent=1 // pred_check
      _
    $region15: #{tpu_custom_call.1} parent=1 // pred_check_branch
      %40 = sbr.rel (0) target = $region17
    $region16: #{tpu_custom_call.1} parent=1 // pred_region
      %42 = dma.done [#allocation3], 8192
    $region17: #{tpu_custom_call.1} parent=1 // pred_fallthru
      _
    // Predicated region
    $region18: #{tpu_custom_call.1} parent=1 // pred_check
      _
    $region19: #{tpu_custom_call.1} parent=1 // pred_check_branch
      %44 = sbr.rel (0) target = $region21
    $region20: #{tpu_custom_call.1} parent=1 // pred_region
      %46 = dma.done [#allocation6], 4096
    $region21: #{tpu_custom_call.1} parent=1 // pred_fallthru
      _
    %v47 = vld [vmem:[#allocation2] sm:$0xff]
    %v48 = vld [vmem:[#allocation2 + $0x8] sm:$0xff]
    %v49 = vld [vmem:[#allocation2 + $0x10] sm:$0xff]
    %v50 = vld [vmem:[#allocation2 + $0x18] sm:$0xff]
    %v51 = vld [vmem:[#allocation2 + $0x20] sm:$0xff]
    %v52 = vld [vmem:[#allocation2 + $0x28] sm:$0xff]
    %v53 = vld [vmem:[#allocation2 + $0x30] sm:$0xff]
    %v54 = vld [vmem:[#allocation2 + $0x38] sm:$0xff]
    %v55 = vld [vmem:[#allocation2 + $0x40] sm:$0xff]
    %v56 = vld [vmem:[#allocation2 + $0x48] sm:$0xff]
    %v57 = vld [vmem:[#allocation2 + $0x50] sm:$0xff]
    %v58 = vld [vmem:[#allocation2 + $0x58] sm:$0xff]
    %v59 = vld [vmem:[#allocation2 + $0x60] sm:$0xff]
    %v60 = vld [vmem:[#allocation2 + $0x68] sm:$0xff]
    %v61 = vld [vmem:[#allocation2 + $0x70] sm:$0xff]
    %v62 = vld [vmem:[#allocation2 + $0x78] sm:$0xff]
    %v63 = vld [vmem:[#allocation2 + $0x80] sm:$0xff]
    %v64 = vld [vmem:[#allocation2 + $0x88] sm:$0xff]
    %v65 = vld [vmem:[#allocation2 + $0x90] sm:$0xff]
    %v66 = vld [vmem:[#allocation2 + $0x98] sm:$0xff]
    %v67 = vld [vmem:[#allocation2 + $0xa0] sm:$0xff]
    %v68 = vld [vmem:[#allocation2 + $0xa8] sm:$0xff]
    %v69 = vld [vmem:[#allocation2 + $0xb0] sm:$0xff]
    %v70 = vld [vmem:[#allocation2 + $0xb8] sm:$0xff]
    %v71 = vld [vmem:[#allocation2 + $0xc0] sm:$0xff]
    %v72 = vld [vmem:[#allocation2 + $0xc8] sm:$0xff]
    %v73 = vld [vmem:[#allocation2 + $0xd0] sm:$0xff]
    %v74 = vld [vmem:[#allocation2 + $0xd8] sm:$0xff]
    %v75 = vld [vmem:[#allocation2 + $0xe0] sm:$0xff]
    %v76 = vld [vmem:[#allocation2 + $0xe8] sm:$0xff]
    %v77 = vld [vmem:[#allocation2 + $0xf0] sm:$0xff]
    %v78 = vld [vmem:[#allocation2 + $0xf8] sm:$0xff]
    %v79 = vld [vmem:[#allocation2 + $0x100] sm:$0xff]
    %v80 = vld [vmem:[#allocation2 + $0x108] sm:$0xff]
    %v81 = vld [vmem:[#allocation2 + $0x110] sm:$0xff]
    %v82 = vld [vmem:[#allocation2 + $0x118] sm:$0xff]
    %v83 = vld [vmem:[#allocation2 + $0x120] sm:$0xff]
    %v84 = vld [vmem:[#allocation2 + $0x128] sm:$0xff]
    %v85 = vld [vmem:[#allocation2 + $0x130] sm:$0xff]
    %v86 = vld [vmem:[#allocation2 + $0x138] sm:$0xff]
    %v87 = vld [vmem:[#allocation2 + $0x140] sm:$0xff]
    %v88 = vld [vmem:[#allocation2 + $0x148] sm:$0xff]
    %v89 = vld [vmem:[#allocation2 + $0x150] sm:$0xff]
    %v90 = vld [vmem:[#allocation2 + $0x158] sm:$0xff]
    %v91 = vld [vmem:[#allocation2 + $0x160] sm:$0xff]
    %v92 = vld [vmem:[#allocation2 + $0x168] sm:$0xff]
    %v93 = vld [vmem:[#allocation2 + $0x170] sm:$0xff]
    %v94 = vld [vmem:[#allocation2 + $0x178] sm:$0xff]
    %v95 = vld [vmem:[#allocation2 + $0x180] sm:$0xff]
    %v96 = vld [vmem:[#allocation2 + $0x188] sm:$0xff]
    %v97 = vld [vmem:[#allocation2 + $0x190] sm:$0xff]
    %v98 = vld [vmem:[#allocation2 + $0x198] sm:$0xff]
    %v99 = vld [vmem:[#allocation2 + $0x1a0] sm:$0xff]
    %v100 = vld [vmem:[#allocation2 + $0x1a8] sm:$0xff]
    %v101 = vld [vmem:[#allocation2 + $0x1b0] sm:$0xff]
    %v102 = vld [vmem:[#allocation2 + $0x1b8] sm:$0xff]
    %v103 = vld [vmem:[#allocation2 + $0x1c0] sm:$0xff]
    %v104 = vld [vmem:[#allocation2 + $0x1c8] sm:$0xff]
    %v105 = vld [vmem:[#allocation2 + $0x1d0] sm:$0xff]
    %v106 = vld [vmem:[#allocation2 + $0x1d8] sm:$0xff]
    %v107 = vld [vmem:[#allocation2 + $0x1e0] sm:$0xff]
    %v108 = vld [vmem:[#allocation2 + $0x1e8] sm:$0xff]
    %v109 = vld [vmem:[#allocation2 + $0x1f0] sm:$0xff]
    %v110 = vld [vmem:[#allocation2 + $0x1f8] sm:$0xff]
    %v111 = vld [vmem:[#allocation5] sm:$0xff]
    %v112 = vld [vmem:[#allocation5 + $0x8] sm:$0xff]
    %v113 = vld [vmem:[#allocation5 + $0x10] sm:$0xff]
    %v114 = vld [vmem:[#allocation5 + $0x18] sm:$0xff]
    %v115 = vld [vmem:[#allocation5 + $0x20] sm:$0xff]
    %v116 = vld [vmem:[#allocation5 + $0x28] sm:$0xff]
    %v117 = vld [vmem:[#allocation5 + $0x30] sm:$0xff]
    %v118 = vld [vmem:[#allocation5 + $0x38] sm:$0xff]
    %v119 = vld [vmem:[#allocation5 + $0x40] sm:$0xff]
    %v120 = vld [vmem:[#allocation5 + $0x48] sm:$0xff]
    %v121 = vld [vmem:[#allocation5 + $0x50] sm:$0xff]
    %v122 = vld [vmem:[#allocation5 + $0x58] sm:$0xff]
    %v123 = vld [vmem:[#allocation5 + $0x60] sm:$0xff]
    %v124 = vld [vmem:[#allocation5 + $0x68] sm:$0xff]
    %v125 = vld [vmem:[#allocation5 + $0x70] sm:$0xff]
    %v126 = vld [vmem:[#allocation5 + $0x78] sm:$0xff]
    %v127 = vld [vmem:[#allocation5 + $0x80] sm:$0xff]
    %v128 = vld [vmem:[#allocation5 + $0x88] sm:$0xff]
    %v129 = vld [vmem:[#allocation5 + $0x90] sm:$0xff]
    %v130 = vld [vmem:[#allocation5 + $0x98] sm:$0xff]
    %v131 = vld [vmem:[#allocation5 + $0xa0] sm:$0xff]
    %v132 = vld [vmem:[#allocation5 + $0xa8] sm:$0xff]
    %v133 = vld [vmem:[#allocation5 + $0xb0] sm:$0xff]
    %v134 = vld [vmem:[#allocation5 + $0xb8] sm:$0xff]
    %v135 = vld [vmem:[#allocation5 + $0xc0] sm:$0xff]
    %v136 = vld [vmem:[#allocation5 + $0xc8] sm:$0xff]
    %v137 = vld [vmem:[#allocation5 + $0xd0] sm:$0xff]
    %v138 = vld [vmem:[#allocation5 + $0xd8] sm:$0xff]
    %v139 = vld [vmem:[#allocation5 + $0xe0] sm:$0xff]
    %v140 = vld [vmem:[#allocation5 + $0xe8] sm:$0xff]
    %v141 = vld [vmem:[#allocation5 + $0xf0] sm:$0xff]
    %v142 = vld [vmem:[#allocation5 + $0xf8] sm:$0xff]
    %v143 = vld [vmem:[%s2] sm:$0x1]
    %v145 = vperm.slane %v143, 0
    %147 = vmatpush.msra.mxu0 %v126
    %148 = vmatpush.msra.mxu0 %v125
    %149 = vmatpush.msra.mxu0 %v124
    %150 = vmatpush.msra.mxu0 %v123
    %151 = vmatpush.msra.mxu0 %v122
    %152 = vmatpush.msra.mxu0 %v121
    %153 = vmatpush.msra.mxu0 %v120
    %154 = vmatpush.msra.mxu0 %v119
    %155 = vmatpush.msra.mxu0 %v118
    %156 = vmatpush.msra.mxu0 %v117
    %157 = vmatpush.msra.mxu0 %v116
    %158 = vmatpush.msra.mxu0 %v115
    %159 = vmatpush.msra.mxu0 %v114
    %160 = vmatpush.msra.mxu0 %v113
    %161 = vmatpush.msra.mxu0 %v112
    %162 = vmatpush.msra.mxu0 %v111
    %163 = vmatmul.f32.gmra.mxu0 %v47
    %v164 = vpop.f32.mrf.mxu0
    %v165 = vadd.f32 %v145, %v164
    %166 = vmatmul.f32.gmra.mxu0 %v49
    %v167 = vpop.f32.mrf.mxu0
    %v168 = vadd.f32 %v145, %v167
    %169 = vmatmul.f32.gmra.mxu0 %v51
    %v170 = vpop.f32.mrf.mxu0
    %v171 = vadd.f32 %v145, %v170
    %172 = vmatmul.f32.gmra.mxu0 %v53
    %v173 = vpop.f32.mrf.mxu0
    %v174 = vadd.f32 %v145, %v173
    %175 = vmatmul.f32.gmra.mxu0 %v55
    %v176 = vpop.f32.mrf.mxu0
    %v177 = vadd.f32 %v145, %v176
    %178 = vmatmul.f32.gmra.mxu0 %v57
    %v179 = vpop.f32.mrf.mxu0
    %v180 = vadd.f32 %v145, %v179
    %181 = vmatmul.f32.gmra.mxu0 %v59
    %v182 = vpop.f32.mrf.mxu0
    %v183 = vadd.f32 %v145, %v182
    %184 = vmatmul.f32.gmra.mxu0 %v61
    %v185 = vpop.f32.mrf.mxu0
    %v186 = vadd.f32 %v145, %v185
    %187 = vmatmul.f32.gmra.mxu0 %v63
    %v188 = vpop.f32.mrf.mxu0
    %v189 = vadd.f32 %v145, %v188
    %190 = vmatmul.f32.gmra.mxu0 %v65
    %v191 = vpop.f32.mrf.mxu0
    %v192 = vadd.f32 %v145, %v191
    %193 = vmatmul.f32.gmra.mxu0 %v67
    %v194 = vpop.f32.mrf.mxu0
    %v195 = vadd.f32 %v145, %v194
    %196 = vmatmul.f32.gmra.mxu0 %v69
    %v197 = vpop.f32.mrf.mxu0
    %v198 = vadd.f32 %v145, %v197
    %199 = vmatmul.f32.gmra.mxu0 %v71
    %v200 = vpop.f32.mrf.mxu0
    %v201 = vadd.f32 %v145, %v200
    %202 = vmatmul.f32.gmra.mxu0 %v73
    %v203 = vpop.f32.mrf.mxu0
    %v204 = vadd.f32 %v145, %v203
    %205 = vmatmul.f32.gmra.mxu0 %v75
    %v206 = vpop.f32.mrf.mxu0
    %v207 = vadd.f32 %v145, %v206
    %208 = vmatmul.f32.gmra.mxu0 %v77
    %v209 = vpop.f32.mrf.mxu0
    %v210 = vadd.f32 %v145, %v209
    %211 = vmatmul.f32.gmra.mxu0 %v79
    %v212 = vpop.f32.mrf.mxu0
    %v213 = vadd.f32 %v145, %v212
    %214 = vmatmul.f32.gmra.mxu0 %v81
    %v215 = vpop.f32.mrf.mxu0
    %v216 = vadd.f32 %v145, %v215
    %217 = vmatmul.f32.gmra.mxu0 %v83
    %v218 = vpop.f32.mrf.mxu0
    %v219 = vadd.f32 %v145, %v218
    %220 = vmatmul.f32.gmra.mxu0 %v85
    %v221 = vpop.f32.mrf.mxu0
    %v222 = vadd.f32 %v145, %v221
    %223 = vmatmul.f32.gmra.mxu0 %v87
    %v224 = vpop.f32.mrf.mxu0
    %v225 = vadd.f32 %v145, %v224
    %226 = vmatmul.f32.gmra.mxu0 %v89
    %v227 = vpop.f32.mrf.mxu0
    %v228 = vadd.f32 %v145, %v227
    %229 = vmatmul.f32.gmra.mxu0 %v91
    %v230 = vpop.f32.mrf.mxu0
    %v231 = vadd.f32 %v145, %v230
    %232 = vmatmul.f32.gmra.mxu0 %v93
    %v233 = vpop.f32.mrf.mxu0
    %v234 = vadd.f32 %v145, %v233
    %235 = vmatmul.f32.gmra.mxu0 %v95
    %v236 = vpop.f32.mrf.mxu0
    %v237 = vadd.f32 %v145, %v236
    %238 = vmatmul.f32.gmra.mxu0 %v97
    %v239 = vpop.f32.mrf.mxu0
    %v240 = vadd.f32 %v145, %v239
    %241 = vmatmul.f32.gmra.mxu0 %v99
    %v242 = vpop.f32.mrf.mxu0
    %v243 = vadd.f32 %v145, %v242
    %244 = vmatmul.f32.gmra.mxu0 %v101
    %v245 = vpop.f32.mrf.mxu0
    %v246 = vadd.f32 %v145, %v245
    %247 = vmatmul.f32.gmra.mxu0 %v103
    %v248 = vpop.f32.mrf.mxu0
    %v249 = vadd.f32 %v145, %v248
    %250 = vmatmul.f32.gmra.mxu0 %v105
    %v251 = vpop.f32.mrf.mxu0
    %v252 = vadd.f32 %v145, %v251
    %253 = vmatmul.f32.gmra.mxu0 %v107
    %v254 = vpop.f32.mrf.mxu0
    %v255 = vadd.f32 %v145, %v254
    %256 = vmatmul.f32.gmra.mxu0 %v109
    %v257 = vpop.f32.mrf.mxu0
    %v258 = vadd.f32 %v145, %v257
    %259 = vdwg.mxu0
    %260 = vmatpush.msra.mxu0 %v142
    %261 = vmatpush.msra.mxu0 %v141
    %262 = vmatpush.msra.mxu0 %v140
    %263 = vmatpush.msra.mxu0 %v139
    %264 = vmatpush.msra.mxu0 %v138
    %265 = vmatpush.msra.mxu0 %v137
    %266 = vmatpush.msra.mxu0 %v136
    %267 = vmatpush.msra.mxu0 %v135
    %268 = vmatpush.msra.mxu0 %v134
    %269 = vmatpush.msra.mxu0 %v133
    %270 = vmatpush.msra.mxu0 %v132
    %271 = vmatpush.msra.mxu0 %v131
    %272 = vmatpush.msra.mxu0 %v130
    %273 = vmatpush.msra.mxu0 %v129
    %274 = vmatpush.msra.mxu0 %v128
    %275 = vmatpush.msra.mxu0 %v127
    %276 = vmatmul.f32.gmra.mxu0 %v48
    %v277 = vpop.f32.mrf.mxu0
    %v278 = vadd.f32 %v165, %v277
    %279 = vmatmul.f32.gmra.mxu0 %v50
    %v280 = vpop.f32.mrf.mxu0
    %v281 = vadd.f32 %v168, %v280
    %282 = vmatmul.f32.gmra.mxu0 %v52
    %v283 = vpop.f32.mrf.mxu0
    %v284 = vadd.f32 %v171, %v283
    %285 = vmatmul.f32.gmra.mxu0 %v54
    %v286 = vpop.f32.mrf.mxu0
    %v287 = vadd.f32 %v174, %v286
    %288 = vmatmul.f32.gmra.mxu0 %v56
    %v289 = vpop.f32.mrf.mxu0
    %v290 = vadd.f32 %v177, %v289
    %291 = vmatmul.f32.gmra.mxu0 %v58
    %v292 = vpop.f32.mrf.mxu0
    %v293 = vadd.f32 %v180, %v292
    %294 = vmatmul.f32.gmra.mxu0 %v60
    %v295 = vpop.f32.mrf.mxu0
    %v296 = vadd.f32 %v183, %v295
    %297 = vmatmul.f32.gmra.mxu0 %v62
    %v298 = vpop.f32.mrf.mxu0
    %v299 = vadd.f32 %v186, %v298
    %300 = vmatmul.f32.gmra.mxu0 %v64
    %v301 = vpop.f32.mrf.mxu0
    %v302 = vadd.f32 %v189, %v301
    %303 = vmatmul.f32.gmra.mxu0 %v66
    %v304 = vpop.f32.mrf.mxu0
    %v305 = vadd.f32 %v192, %v304
    %306 = vmatmul.f32.gmra.mxu0 %v68
    %v307 = vpop.f32.mrf.mxu0
    %v308 = vadd.f32 %v195, %v307
    %309 = vmatmul.f32.gmra.mxu0 %v70
    %v310 = vpop.f32.mrf.mxu0
    %v311 = vadd.f32 %v198, %v310
    %312 = vmatmul.f32.gmra.mxu0 %v72
    %v313 = vpop.f32.mrf.mxu0
    %v314 = vadd.f32 %v201, %v313
    %315 = vmatmul.f32.gmra.mxu0 %v74
    %v316 = vpop.f32.mrf.mxu0
    %v317 = vadd.f32 %v204, %v316
    %318 = vmatmul.f32.gmra.mxu0 %v76
    %v319 = vpop.f32.mrf.mxu0
    %v320 = vadd.f32 %v207, %v319
    %321 = vmatmul.f32.gmra.mxu0 %v78
    %v322 = vpop.f32.mrf.mxu0
    %v323 = vadd.f32 %v210, %v322
    %324 = vmatmul.f32.gmra.mxu0 %v80
    %v325 = vpop.f32.mrf.mxu0
    %v326 = vadd.f32 %v213, %v325
    %327 = vmatmul.f32.gmra.mxu0 %v82
    %v328 = vpop.f32.mrf.mxu0
    %v329 = vadd.f32 %v216, %v328
    %330 = vmatmul.f32.gmra.mxu0 %v84
    %v331 = vpop.f32.mrf.mxu0
    %v332 = vadd.f32 %v219, %v331
    %333 = vmatmul.f32.gmra.mxu0 %v86
    %v334 = vpop.f32.mrf.mxu0
    %v335 = vadd.f32 %v222, %v334
    %336 = vmatmul.f32.gmra.mxu0 %v88
    %v337 = vpop.f32.mrf.mxu0
    %v338 = vadd.f32 %v225, %v337
    %339 = vmatmul.f32.gmra.mxu0 %v90
    %v340 = vpop.f32.mrf.mxu0
    %v341 = vadd.f32 %v228, %v340
    %342 = vmatmul.f32.gmra.mxu0 %v92
    %v343 = vpop.f32.mrf.mxu0
    %v344 = vadd.f32 %v231, %v343
    %345 = vmatmul.f32.gmra.mxu0 %v94
    %v346 = vpop.f32.mrf.mxu0
    %v347 = vadd.f32 %v234, %v346
    %348 = vmatmul.f32.gmra.mxu0 %v96
    %v349 = vpop.f32.mrf.mxu0
    %v350 = vadd.f32 %v237, %v349
    %351 = vmatmul.f32.gmra.mxu0 %v98
    %v352 = vpop.f32.mrf.mxu0
    %v353 = vadd.f32 %v240, %v352
    %354 = vmatmul.f32.gmra.mxu0 %v100
    %v355 = vpop.f32.mrf.mxu0
    %v356 = vadd.f32 %v243, %v355
    %357 = vmatmul.f32.gmra.mxu0 %v102
    %v358 = vpop.f32.mrf.mxu0
    %v359 = vadd.f32 %v246, %v358
    %360 = vmatmul.f32.gmra.mxu0 %v104
    %v361 = vpop.f32.mrf.mxu0
    %v362 = vadd.f32 %v249, %v361
    %363 = vmatmul.f32.gmra.mxu0 %v106
    %v364 = vpop.f32.mrf.mxu0
    %v365 = vadd.f32 %v252, %v364
    %366 = vmatmul.f32.gmra.mxu0 %v108
    %v367 = vpop.f32.mrf.mxu0
    %v368 = vadd.f32 %v255, %v367
    %369 = vmatmul.f32.gmra.mxu0 %v110
    %v370 = vpop.f32.mrf.mxu0
    %v371 = vadd.f32 %v258, %v370
    %372 = vdwg.mxu0
    %v373 = vmax.f32 %v278, 0.0
    %v374 = vmax.f32 %v281, 0.0
    %v375 = vmax.f32 %v284, 0.0
    %v376 = vmax.f32 %v287, 0.0
    %v377 = vmax.f32 %v290, 0.0
    %v378 = vmax.f32 %v293, 0.0
    %v379 = vmax.f32 %v296, 0.0
    %v380 = vmax.f32 %v299, 0.0
    %v381 = vmax.f32 %v302, 0.0
    %v382 = vmax.f32 %v305, 0.0
    %v383 = vmax.f32 %v308, 0.0
    %v384 = vmax.f32 %v311, 0.0
    %v385 = vmax.f32 %v314, 0.0
    %v386 = vmax.f32 %v317, 0.0
    %v387 = vmax.f32 %v320, 0.0
    %v388 = vmax.f32 %v323, 0.0
    %v389 = vmax.f32 %v326, 0.0
    %v390 = vmax.f32 %v329, 0.0
    %v391 = vmax.f32 %v332, 0.0
    %v392 = vmax.f32 %v335, 0.0
    %v393 = vmax.f32 %v338, 0.0
    %v394 = vmax.f32 %v341, 0.0
    %v395 = vmax.f32 %v344, 0.0
    %v396 = vmax.f32 %v347, 0.0
    %v397 = vmax.f32 %v350, 0.0
    %v398 = vmax.f32 %v353, 0.0
    %v399 = vmax.f32 %v356, 0.0
    %v400 = vmax.f32 %v359, 0.0
    %v401 = vmax.f32 %v362, 0.0
    %v402 = vmax.f32 %v365, 0.0
    %v403 = vmax.f32 %v368, 0.0
    %v404 = vmax.f32 %v371, 0.0
    %405 = vst [vmem:[#allocation7] sm:$0xff] %v373
    %406 = vst [vmem:[#allocation7 + $0x8] sm:$0xff] %v374
    %407 = vst [vmem:[#allocation7 + $0x10] sm:$0xff] %v375
    %408 = vst [vmem:[#allocation7 + $0x18] sm:$0xff] %v376
    %409 = vst [vmem:[#allocation7 + $0x20] sm:$0xff] %v377
    %410 = vst [vmem:[#allocation7 + $0x28] sm:$0xff] %v378
    %411 = vst [vmem:[#allocation7 + $0x30] sm:$0xff] %v379
    %412 = vst [vmem:[#allocation7 + $0x38] sm:$0xff] %v380
    %413 = vst [vmem:[#allocation7 + $0x40] sm:$0xff] %v381
    %414 = vst [vmem:[#allocation7 + $0x48] sm:$0xff] %v382
    %415 = vst [vmem:[#allocation7 + $0x50] sm:$0xff] %v383
    %416 = vst [vmem:[#allocation7 + $0x58] sm:$0xff] %v384
    %417 = vst [vmem:[#allocation7 + $0x60] sm:$0xff] %v385
    %418 = vst [vmem:[#allocation7 + $0x68] sm:$0xff] %v386
    %419 = vst [vmem:[#allocation7 + $0x70] sm:$0xff] %v387
    %420 = vst [vmem:[#allocation7 + $0x78] sm:$0xff] %v388
    %421 = vst [vmem:[#allocation7 + $0x80] sm:$0xff] %v389
    %422 = vst [vmem:[#allocation7 + $0x88] sm:$0xff] %v390
    %423 = vst [vmem:[#allocation7 + $0x90] sm:$0xff] %v391
    %424 = vst [vmem:[#allocation7 + $0x98] sm:$0xff] %v392
    %425 = vst [vmem:[#allocation7 + $0xa0] sm:$0xff] %v393
    %426 = vst [vmem:[#allocation7 + $0xa8] sm:$0xff] %v394
    %427 = vst [vmem:[#allocation7 + $0xb0] sm:$0xff] %v395
    %428 = vst [vmem:[#allocation7 + $0xb8] sm:$0xff] %v396
    %429 = vst [vmem:[#allocation7 + $0xc0] sm:$0xff] %v397
    %430 = vst [vmem:[#allocation7 + $0xc8] sm:$0xff] %v398
    %431 = vst [vmem:[#allocation7 + $0xd0] sm:$0xff] %v399
    %432 = vst [vmem:[#allocation7 + $0xd8] sm:$0xff] %v400
    %433 = vst [vmem:[#allocation7 + $0xe0] sm:$0xff] %v401
    %434 = vst [vmem:[#allocation7 + $0xe8] sm:$0xff] %v402
    %435 = vst [vmem:[#allocation7 + $0xf0] sm:$0xff] %v403
    %436 = vst [vmem:[#allocation7 + $0xf8] sm:$0xff] %v404
    // Predicated region
    $region22: #{tpu_custom_call.1} parent=1 // pred_check
      _
    $region23: #{tpu_custom_call.1} parent=1 // pred_check_branch
      %438 = sbr.rel (0) target = $region25
    $region24: #{tpu_custom_call.1} parent=1 // pred_region
      %440 = vsyncadd [#allocation4], 0
      %s441 = sshll.u32 [#allocation7], 4
      %s442 = int_to_ptr.vmem [resolvable:$true] %s441
      %s443 = sshll.u32 %s3, 4
      %s444 = int_to_ptr.hbm [resolvable:$true] %s443
      %449 = dma.vmem_to_hbm [thread:$0]  %s442, 4096, %s444, [#allocation4], 128, 128, 8
    $region25: #{tpu_custom_call.1} parent=1 // pred_fallthru
      _
    // Predicated region
    $region26: #{tpu_custom_call.1} parent=1 // pred_check
      _
    $region27: #{tpu_custom_call.1} parent=1 // pred_check_branch
      %451 = sbr.rel (0) target = $region29
    $region28: #{tpu_custom_call.1} parent=1 // pred_region
      %453 = dma.done [#allocation4], 4096
    $region29: #{tpu_custom_call.1} parent=1 // pred_fallthru
      _
    %454 = vsyncpa [#allocation3], 1
    %455 = vsyncpa [#allocation6], 1
    %456 = vsyncpa [#allocation4], 1

</llo_original>
